<compile_context>
chip_gen: v5e
topology: v5e:2x2
jax: 0.10.0
libtpu: 0.0.40
codegen_flags: <defaults>
</compile_context>

<pallas_src>
import functools

import jax
import jax.numpy as jnp
from jax.experimental import pallas as pl
from jax.experimental.pallas import tpu as pltpu

BN_EPS = 1e-5
LANE = 128
DEFAULT_TILE_M = 512                      # re-derived smaller for tiny inputs
VMEM_LIMIT_BYTES = 32 * 1024 * 1024       # safe on v5e/v6e (128 MiB) and v7x (64 MiB)


def _round_up(x, m):
    return (x + m - 1) // m * m


# ----------------------------- Pallas kernels -----------------------------

def _conv_stats_kernel(p_ref, w_ref, y_ref, st_ref):
    """One M-tile: conv matmul (bf16 in, f32 acc) + partial BN statistics."""
    y = jnp.dot(p_ref[...], w_ref[...], preferred_element_type=jnp.float32)
    y_ref[...] = y
    s = jnp.sum(y, axis=0, keepdims=True)         # (1, Cpad) partial sum
    sq = jnp.sum(y * y, axis=0, keepdims=True)    # (1, Cpad) partial sum of squares
    st_ref[0] = jnp.concatenate([s, sq], axis=0)  # (2, Cpad) per-tile stats


def _bn_apply_kernel(apply_relu, has_residual, *refs):
    """One M-tile: fused BN affine (y*scale+shift) [+ residual] [+ ReLU]."""
    if has_residual:
        y_ref, sc_ref, sh_ref, r_ref, o_ref = refs
    else:
        y_ref, sc_ref, sh_ref, o_ref = refs
        r_ref = None
    y = y_ref[...] * sc_ref[...] + sh_ref[...]
    if has_residual:
        y = y + r_ref[...]
    if apply_relu:
        y = jnp.maximum(y, 0.0)
    o_ref[...] = y


# ------------------------------- JAX glue ---------------------------------

def _im2col(x, kh, kw, stride, pad):
    """x: (N,H,W,C) -> patches (N*Ho*Wo, kh*kw*C), row-major over (kh,kw,C)."""
    n, h, w, c = x.shape
    sh, sw = stride
    xp = jnp.pad(x, ((0, 0), (pad, pad), (pad, pad), (0, 0)))
    ho = (h + 2 * pad - kh) // sh + 1
    wo = (w + 2 * pad - kw) // sw + 1
    cols = []
    for i in range(kh):
        for j in range(kw):
            cols.append(xp[:, i:i + (ho - 1) * sh + 1:sh,
                           j:j + (wo - 1) * sw + 1:sw, :])
    patches = jnp.concatenate(cols, axis=-1)
    return patches.reshape(n * ho * wo, kh * kw * c), ho, wo


def _avg_pool(x, ksize):
    """AvgPool2d(kernel=stride=ksize, padding=0).  NHWC input."""
    kh, kw = ksize
    n, h, w, c = x.shape
    # TODO(synk): ceil_mode=True trailing partial windows not implemented
    # (shapes used here divide evenly so the result is identical).
    assert h % kh == 0 and w % kw == 0
    return x.reshape(n, h // kh, kh, w // kw, kw, c).mean(axis=(2, 4))


def _pick_tile_m(m):
    t = DEFAULT_TILE_M
    while t > 8 and t > m:
        t //= 2
    return max(8, t)


def conv_bn_pallas(x, w, gamma, beta, stride=(1, 1), relu=False, residual=None,
                   tile_m=None):
    """ConvBNLayer forward (conv + BN [+ relu] [+ residual-add + relu]).

    x: (N,H,W,Cin) NHWC, w: (KH,KW,Cin,Cout) HWIO.  BN uses batch statistics
    (training-mode), computed globally over N*Ho*Wo via the two-pass scheme.
    """
    n = x.shape[0]
    kh, kw, cin, cout = w.shape
    pad = (kh - 1) // 2
    patches, ho, wo = _im2col(x, kh, kw, stride, pad)
    m, k = patches.shape

    k_pad = _round_up(k, LANE)
    c_pad = _round_up(cout, LANE)
    tm = _pick_tile_m(m) if tile_m is None else max(8, _round_up(tile_m, 8))
    m_pad = _round_up(m, tm)
    n_tiles = m_pad // tm

    # Zero-pad to lane-dense / tile-aligned shapes; MXU operands in bf16.
    patches_p = jnp.pad(patches.astype(jnp.bfloat16),
                        ((0, m_pad - m), (0, k_pad - k)))
    wmat_p = jnp.pad(w.reshape(k, cout).astype(jnp.bfloat16),
                     ((0, k_pad - k), (0, c_pad - cout)))

    # ---------------- pass 1: tiled conv matmul + partial BN stats ----------
    p1_cost = pl.CostEstimate(
        flops=2 * m_pad * k_pad * c_pad,
        transcendentals=0,
        bytes_accessed=(m_pad * k_pad * 2 + k_pad * c_pad * 2
                        + m_pad * c_pad * 4 + n_tiles * 2 * c_pad * 4))
    y_conv, stats = pl.pallas_call(
        _conv_stats_kernel,
        out_shape=(jax.ShapeDtypeStruct((m_pad, c_pad), jnp.float32),
                   jax.ShapeDtypeStruct((n_tiles, 2, c_pad), jnp.float32)),
        grid_spec=pltpu.PrefetchScalarGridSpec(
            num_scalar_prefetch=0,
            grid=(n_tiles,),
            in_specs=[
                pl.BlockSpec((tm, k_pad), lambda i: (i, 0)),      # streamed
                pl.BlockSpec((k_pad, c_pad), lambda i: (0, 0)),   # resident
            ],
            out_specs=(
                pl.BlockSpec((tm, c_pad), lambda i: (i, 0)),
                pl.BlockSpec((1, 2, c_pad), lambda i: (i, 0, 0)),
            )),
        compiler_params=pltpu.CompilerParams(
            dimension_semantics=("parallel",),
            vmem_limit_bytes=VMEM_LIMIT_BYTES),
        cost_estimate=p1_cost,
    )(patches_p, wmat_p)

    # ------------- BN finalize: fused affine (tiny (Cpad,) ops) -------------
    tot = jnp.sum(stats, axis=0)                      # (2, Cpad)
    mean = tot[0] / float(m)
    var = jnp.maximum(tot[1] / float(m) - mean * mean, 0.0)
    gamma_p = jnp.pad(gamma.astype(jnp.float32), (0, c_pad - cout))
    beta_p = jnp.pad(beta.astype(jnp.float32), (0, c_pad - cout))
    scale = gamma_p * jax.lax.rsqrt(var + BN_EPS)
    shift = beta_p - mean * scale
    scale = scale.reshape(1, c_pad)
    shift = shift.reshape(1, c_pad)

    # ---------------- pass 2: BN affine (+ residual) (+ ReLU) ---------------
    has_res = residual is not None
    apply_relu = relu or has_res
    args = [y_conv, scale, shift]
    in_specs = [
        pl.BlockSpec((tm, c_pad), lambda i: (i, 0)),
        pl.BlockSpec((1, c_pad), lambda i: (0, 0)),   # resident
        pl.BlockSpec((1, c_pad), lambda i: (0, 0)),   # resident
    ]
    if has_res:
        res_p = jnp.pad(residual.reshape(m, cout).astype(jnp.float32),
                        ((0, m_pad - m), (0, c_pad - cout)))
        args.append(res_p)
        in_specs.append(pl.BlockSpec((tm, c_pad), lambda i: (i, 0)))

    p2_cost = pl.CostEstimate(
        flops=4 * m_pad * c_pad,
        transcendentals=0,
        bytes_accessed=(2 + int(has_res)) * m_pad * c_pad * 4 + 2 * c_pad * 4)
    out = pl.pallas_call(
        functools.partial(_bn_apply_kernel, apply_relu, has_res),
        out_shape=jax.ShapeDtypeStruct((m_pad, c_pad), jnp.float32),
        grid_spec=pltpu.PrefetchScalarGridSpec(
            num_scalar_prefetch=0,
            grid=(n_tiles,),
            in_specs=in_specs,
            out_specs=pl.BlockSpec((tm, c_pad), lambda i: (i, 0))),
        compiler_params=pltpu.CompilerParams(
            dimension_semantics=("parallel",),
            vmem_limit_bytes=VMEM_LIMIT_BYTES),
        cost_estimate=p2_cost,
    )(*args)

    return out[:m, :cout].reshape(n, ho, wo, cout)


def basic_block_forward(x_nchw, params, stride, shortcut, if_first, tile_m=None):
    """BasicBlock.forward.  Input/output are NCHW (PyTorch convention)."""
    x = jnp.transpose(x_nchw, (0, 2, 3, 1))  # -> NHWC

    # conv0: 3x3, stride, BN, ReLU
    y = conv_bn_pallas(x, params['w0'], params['g0'], params['b0'],
                       stride=stride, relu=True, tile_m=tile_m)

    # shortcut branch
    if shortcut:
        short = x
    else:
        is_vd = (not if_first) and stride[0] != 1
        xs = _avg_pool(x, stride) if is_vd else x
        s_stride = (1, 1) if is_vd else stride
        short = conv_bn_pallas(xs, params['ws'], params['gs'], params['bs'],
                               stride=s_stride, relu=False, tile_m=tile_m)

    # conv1: 3x3, stride 1, BN, fused (short + conv1) -> ReLU
    out = conv_bn_pallas(y, params['w1'], params['g1'], params['b1'],
                         stride=(1, 1), relu=False, residual=short,
                         tile_m=tile_m)
    return jnp.transpose(out, (0, 3, 1, 2))  # -> NCHW


# --------------------------- reference (pure JAX) ---------------------------

def _ref_conv_bn(x, w, gamma, beta, stride, pad, relu):
    y = jax.lax.conv_general_dilated(
        x, w, window_strides=stride, padding=[(pad, pad), (pad, pad)],
        dimension_numbers=('NHWC', 'HWIO', 'NHWC'))
    mean = y.mean(axis=(0, 1, 2), keepdims=True)
    var = ((y - mean) ** 2).mean(axis=(0, 1, 2), keepdims=True)
    y = (y - mean) * jax.lax.rsqrt(var + BN_EPS) * gamma + beta
    if relu:
        y = jnp.maximum(y, 0.0)
    return y


def ref_block(x_nchw, params, stride, shortcut, if_first):
    x = jnp.transpose(x_nchw, (0, 2, 3, 1))
    y = _ref_conv_bn(x, params['w0'], params['g0'], params['b0'], stride, 1, True)
    conv1 = _ref_conv_bn(y, params['w1'], params['g1'], params['b1'], (1, 1), 1, False)
    if shortcut:
        short = x
    else:
        is_vd = (not if_first) and stride[0] != 1
        xs = _avg_pool(x, stride) if is_vd else x
        short = _ref_conv_bn(xs, params['ws'], params['gs'], params['bs'],
                             (1, 1) if is_vd else stride, 0, False)
    out = jnp.maximum(short + conv1, 0.0)
    return jnp.transpose(out, (0, 3, 1, 2))


# --------------------------------- params ----------------------------------

def make_params(key, cin, cout, shortcut):
    ks = jax.random.split(key, 9)
    p = {
        'w0': 0.1 * jax.random.normal(ks[0], (3, 3, cin, cout), jnp.float32),
        'g0': 1.0 + 0.1 * jax.random.normal(ks[1], (cout,), jnp.float32),
        'b0': 0.1 * jax.random.normal(ks[2], (cout,), jnp.float32),
        'w1': 0.1 * jax.random.normal(ks[3], (3, 3, cout, cout), jnp.float32),
        'g1': 1.0 + 0.1 * jax.random.normal(ks[4], (cout,), jnp.float32),
        'b1': 0.1 * jax.random.normal(ks[5], (cout,), jnp.float32),
    }
    if not shortcut:
        p['ws'] = 0.1 * jax.random.normal(ks[6], (1, 1, cin, cout), jnp.float32)
        p['gs'] = 1.0 + 0.1 * jax.random.normal(ks[7], (cout,), jnp.float32)
        p['bs'] = 0.1 * jax.random.normal(ks[8], (cout,), jnp.float32)
    return p


if __name__ == "__main__":
    key = jax.random.PRNGKey(0)
    kx, kp1, kp2 = jax.random.split(key, 3)

    # NCHW input, like the PyTorch module.
    x = jax.random.normal(kx, (2, 8, 16, 16), jnp.float32)

    block_fn = jax.jit(basic_block_forward,
                       static_argnames=("stride", "shortcut", "if_first", "tile_m"))

    # bf16 MXU operands (f32 accumulation) -> ~1e-2 scale deviations vs the
    # all-f32 reference, hence the tolerances below.
    RTOL, ATOL = 2e-2, 3e-2

    # Config 1: identity shortcut (shortcut=True, stride=(1,1), Cin == Cout).
    p1 = make_params(kp1, 8, 8, shortcut=True)
    out1 = block_fn(x, p1, stride=(1, 1), shortcut=True, if_first=False, tile_m=128)
    jax.block_until_ready(out1)
    ref1 = ref_block(x, p1, (1, 1), True, False)
    assert out1.shape == (2, 8, 16, 16)
    assert jnp.allclose(out1, ref1, rtol=RTOL, atol=ATOL), \
        float(jnp.max(jnp.abs(out1 - ref1)))

    # Config 2: projection shortcut with vd avg-pool (shortcut=False, stride=(2,1)).
    p2 = make_params(kp2, 8, 16, shortcut=False)
    out2 = block_fn(x, p2, stride=(2, 1), shortcut=False, if_first=False, tile_m=128)
    jax.block_until_ready(out2)
    ref2 = ref_block(x, p2, (2, 1), False, False)
    assert out2.shape == (2, 16, 8, 16)
    assert jnp.allclose(out2, ref2, rtol=RTOL, atol=ATOL), \
        float(jnp.max(jnp.abs(out2 - ref2)))

    print("KERNEL_OK")
</pallas_src>

<mosaic_0001>
module attributes {stable_mosaic.version = 11 : i64} {
  func.func @_conv_stats_kernel(%arg0: i32, %arg1: memref<128x128xbf16, #tpu.memory_space<vmem>>, %arg2: memref<128x128xbf16, #tpu.memory_space<vmem>>, %arg3: memref<128x128xf32, #tpu.memory_space<vmem>>, %arg4: memref<1x2x128xf32, #tpu.memory_space<vmem>>) attributes {dimension_semantics = [#tpu.dimension_semantics<parallel>], iteration_bounds = array<i64: 4>, scalar_prefetch = 0 : i64, scratch_operands = 0 : i64, tpu.core_type = #tpu.core_type<tc>, window_params = [{transform_indices = @transform_0, window_bounds = array<i64: 128, 128>}, {pipeline_mode = #tpu.pipeline_mode<synchronous>, transform_indices = @transform_1, window_bounds = array<i64: 128, 128>}, {transform_indices = @transform_2, window_bounds = array<i64: 128, 128>}, {transform_indices = @transform_3, window_bounds = array<i64: 1, 2, 128>}]} {
    %c0 = arith.constant 0 : index
    %c0_0 = arith.constant 0 : index
    %0 = vector.load %arg1[%c0, %c0_0] : memref<128x128xbf16, #tpu.memory_space<vmem>>, vector<128x128xbf16>
    %c0_1 = arith.constant 0 : index
    %c0_2 = arith.constant 0 : index
    %1 = vector.load %arg2[%c0_1, %c0_2] : memref<128x128xbf16, #tpu.memory_space<vmem>>, vector<128x128xbf16>
    %cst = arith.constant dense<0.000000e+00> : vector<128x128xf32>
    %2 = tpu.matmul %0, %1, %cst {dimension_numbers = #tpu.dot_dimension_numbers<[1], [0], [0], [1], [0, 0, 1, 1], [], []>} : vector<128x128xbf16>, vector<128x128xbf16>, vector<128x128xf32> -> vector<128x128xf32>
    %c0_3 = arith.constant 0 : index
    %c0_4 = arith.constant 0 : index
    %3 = vector.load %arg3[%c0_3, %c0_4] : memref<128x128xf32, #tpu.memory_space<vmem>>, vector<128x128xf32>
    tpu.vector_store %arg3[%c0_3, %c0_4], %2 {strides = array<i32>} : memref<128x128xf32, #tpu.memory_space<vmem>>, vector<128x128xf32>,
    %cst_5 = arith.constant dense<0.000000e+00> : vector<128xf32>
    %4 = vector.multi_reduction <add>, %2, %cst_5 [0] : vector<128x128xf32> to vector<128xf32>
    %5 = vector.shape_cast %4 : vector<128xf32> to vector<1x128xf32>
    %6 = arith.mulf %2, %2 : vector<128x128xf32>
    %cst_6 = arith.constant dense<0.000000e+00> : vector<128xf32>
    %7 = vector.multi_reduction <add>, %6, %cst_6 [0] : vector<128x128xf32> to vector<128xf32>
    %8 = vector.shape_cast %7 : vector<128xf32> to vector<1x128xf32>
    %9 = tpu.concatenate %5, %8 in 0 : vector<1x128xf32>, vector<1x128xf32> -> vector<2x128xf32>
    %c0_7 = arith.constant 0 : index
    %c0_8 = arith.constant 0 : index
    %c0_9 = arith.constant 0 : index
    %10 = vector.load %arg4[%c0_7, %c0_8, %c0_9] : memref<1x2x128xf32, #tpu.memory_space<vmem>>, vector<1x2x128xf32>
    %11 = vector.shape_cast %10 : vector<1x2x128xf32> to vector<2x128xf32>
    %12 = vector.shape_cast %9 : vector<2x128xf32> to vector<1x2x128xf32>
    tpu.vector_store %arg4[%c0_7, %c0_8, %c0_9], %12 {strides = array<i32>} : memref<1x2x128xf32, #tpu.memory_space<vmem>>, vector<1x2x128xf32>,
    return
  }
  func.func @transform_0(%arg0: i32) -> (i32, i32) {
    %c0_i32 = arith.constant 0 : i32
    %c0_i32_0 = arith.constant 0 : i32
    return %arg0, %c0_i32 : i32, i32
  }
  func.func @transform_1(%arg0: i32) -> (i32, i32) {
    %c0_i32 = arith.constant 0 : i32
    %c0_i32_0 = arith.constant 0 : i32
    %c0_i32_1 = arith.constant 0 : i32
    return %c0_i32, %c0_i32_0 : i32, i32
  }
  func.func @transform_2(%arg0: i32) -> (i32, i32) {
    %c0_i32 = arith.constant 0 : i32
    %c0_i32_0 = arith.constant 0 : i32
    return %arg0, %c0_i32 : i32, i32
  }
  func.func @transform_3(%arg0: i32) -> (i32, i32, i32) {
    %c0_i32 = arith.constant 0 : i32
    %c0_i32_0 = arith.constant 0 : i32
    %c0_i32_1 = arith.constant 0 : i32
    return %arg0, %c0_i32, %c0_i32_0 : i32, i32, i32
  }
}

module attributes {stable_mosaic.version = 11 : i64} {
  func.func @_bn_apply_kernel(%arg0: i32, %arg1: memref<128x128xf32, #tpu.memory_space<vmem>>, %arg2: memref<1x128xf32, #tpu.memory_space<vmem>>, %arg3: memref<1x128xf32, #tpu.memory_space<vmem>>, %arg4: memref<128x128xf32, #tpu.memory_space<vmem>>) attributes {dimension_semantics = [#tpu.dimension_semantics<parallel>], iteration_bounds = array<i64: 4>, scalar_prefetch = 0 : i64, scratch_operands = 0 : i64, tpu.core_type = #tpu.core_type<tc>, window_params = [{transform_indices = @transform_0, window_bounds = array<i64: 128, 128>}, {pipeline_mode = #tpu.pipeline_mode<synchronous>, transform_indices = @transform_1, window_bounds = array<i64: 1, 128>}, {pipeline_mode = #tpu.pipeline_mode<synchronous>, transform_indices = @transform_2, window_bounds = array<i64: 1, 128>}, {transform_indices = @transform_3, window_bounds = array<i64: 128, 128>}]} {
    %c0 = arith.constant 0 : index
    %c0_0 = arith.constant 0 : index
    %0 = vector.load %arg1[%c0, %c0_0] : memref<128x128xf32, #tpu.memory_space<vmem>>, vector<128x128xf32>
    %c0_1 = arith.constant 0 : index
    %c0_2 = arith.constant 0 : index
    %1 = vector.load %arg2[%c0_1, %c0_2] : memref<1x128xf32, #tpu.memory_space<vmem>>, vector<1x128xf32>
    %2 = vector.broadcast %1 : vector<1x128xf32> to vector<128x128xf32>
    %3 = arith.mulf %0, %2 : vector<128x128xf32>
    %c0_3 = arith.constant 0 : index
    %c0_4 = arith.constant 0 : index
    %4 = vector.load %arg3[%c0_3, %c0_4] : memref<1x128xf32, #tpu.memory_space<vmem>>, vector<1x128xf32>
    %5 = vector.broadcast %4 : vector<1x128xf32> to vector<128x128xf32>
    %6 = arith.addf %3, %5 : vector<128x128xf32>
    %cst = arith.constant 0.000000e+00 : f32
    %7 = vector.broadcast %cst : f32 to vector<128x128xf32>
    %8 = arith.maximumf %6, %7 : vector<128x128xf32>
    %c0_5 = arith.constant 0 : index
    %c0_6 = arith.constant 0 : index
    %9 = vector.load %arg4[%c0_5, %c0_6] : memref<128x128xf32, #tpu.memory_space<vmem>>, vector<128x128xf32>
    tpu.vector_store %arg4[%c0_5, %c0_6], %8 {strides = array<i32>} : memref<128x128xf32, #tpu.memory_space<vmem>>, vector<128x128xf32>,
    return
  }
  func.func @transform_0(%arg0: i32) -> (i32, i32) {
    %c0_i32 = arith.constant 0 : i32
    %c0_i32_0 = arith.constant 0 : i32
    return %arg0, %c0_i32 : i32, i32
  }
  func.func @transform_1(%arg0: i32) -> (i32, i32) {
    %c0_i32 = arith.constant 0 : i32
    %c0_i32_0 = arith.constant 0 : i32
    %c0_i32_1 = arith.constant 0 : i32
    return %c0_i32, %c0_i32_0 : i32, i32
  }
  func.func @transform_2(%arg0: i32) -> (i32, i32) {
    %c0_i32 = arith.constant 0 : i32
    %c0_i32_0 = arith.constant 0 : i32
    %c0_i32_1 = arith.constant 0 : i32
    return %c0_i32, %c0_i32_0 : i32, i32
  }
  func.func @transform_3(%arg0: i32) -> (i32, i32) {
    %c0_i32 = arith.constant 0 : i32
    %c0_i32_0 = arith.constant 0 : i32
    return %arg0, %c0_i32 : i32, i32
  }
}

module attributes {stable_mosaic.version = 11 : i64} {
  func.func @_bn_apply_kernel(%arg0: i32, %arg1: memref<128x128xf32, #tpu.memory_space<vmem>>, %arg2: memref<1x128xf32, #tpu.memory_space<vmem>>, %arg3: memref<1x128xf32, #tpu.memory_space<vmem>>, %arg4: memref<128x128xf32, #tpu.memory_space<vmem>>, %arg5: memref<128x128xf32, #tpu.memory_space<vmem>>) attributes {dimension_semantics = [#tpu.dimension_semantics<parallel>], iteration_bounds = array<i64: 4>, scalar_prefetch = 0 : i64, scratch_operands = 0 : i64, tpu.core_type = #tpu.core_type<tc>, window_params = [{transform_indices = @transform_0, window_bounds = array<i64: 128, 128>}, {pipeline_mode = #tpu.pipeline_mode<synchronous>, transform_indices = @transform_1, window_bounds = array<i64: 1, 128>}, {pipeline_mode = #tpu.pipeline_mode<synchronous>, transform_indices = @transform_2, window_bounds = array<i64: 1, 128>}, {transform_indices = @transform_3, window_bounds = array<i64: 128, 128>}, {transform_indices = @transform_4, window_bounds = array<i64: 128, 128>}]} {
    %c0 = arith.constant 0 : index
    %c0_0 = arith.constant 0 : index
    %0 = vector.load %arg1[%c0, %c0_0] : memref<128x128xf32, #tpu.memory_space<vmem>>, vector<128x128xf32>
    %c0_1 = arith.constant 0 : index
    %c0_2 = arith.constant 0 : index
    %1 = vector.load %arg2[%c0_1, %c0_2] : memref<1x128xf32, #tpu.memory_space<vmem>>, vector<1x128xf32>
    %2 = vector.broadcast %1 : vector<1x128xf32> to vector<128x128xf32>
    %3 = arith.mulf %0, %2 : vector<128x128xf32>
    %c0_3 = arith.constant 0 : index
    %c0_4 = arith.constant 0 : index
    %4 = vector.load %arg3[%c0_3, %c0_4] : memref<1x128xf32, #tpu.memory_space<vmem>>, vector<1x128xf32>
    %5 = vector.broadcast %4 : vector<1x128xf32> to vector<128x128xf32>
    %6 = arith.addf %3, %5 : vector<128x128xf32>
    %c0_5 = arith.constant 0 : index
    %c0_6 = arith.constant 0 : index
    %7 = vector.load %arg4[%c0_5, %c0_6] : memref<128x128xf32, #tpu.memory_space<vmem>>, vector<128x128xf32>
    %8 = arith.addf %6, %7 : vector<128x128xf32>
    %cst = arith.constant 0.000000e+00 : f32
    %9 = vector.broadcast %cst : f32 to vector<128x128xf32>
    %10 = arith.maximumf %8, %9 : vector<128x128xf32>
    %c0_7 = arith.constant 0 : index
    %c0_8 = arith.constant 0 : index
    %11 = vector.load %arg5[%c0_7, %c0_8] : memref<128x128xf32, #tpu.memory_space<vmem>>, vector<128x128xf32>
    tpu.vector_store %arg5[%c0_7, %c0_8], %10 {strides = array<i32>} : memref<128x128xf32, #tpu.memory_space<vmem>>, vector<128x128xf32>,
    return
  }
  func.func @transform_0(%arg0: i32) -> (i32, i32) {
    %c0_i32 = arith.constant 0 : i32
    %c0_i32_0 = arith.constant 0 : i32
    return %arg0, %c0_i32 : i32, i32
  }
  func.func @transform_1(%arg0: i32) -> (i32, i32) {
    %c0_i32 = arith.constant 0 : i32
    %c0_i32_0 = arith.constant 0 : i32
    %c0_i32_1 = arith.constant 0 : i32
    return %c0_i32, %c0_i32_0 : i32, i32
  }
  func.func @transform_2(%arg0: i32) -> (i32, i32) {
    %c0_i32 = arith.constant 0 : i32
    %c0_i32_0 = arith.constant 0 : i32
    %c0_i32_1 = arith.constant 0 : i32
    return %c0_i32, %c0_i32_0 : i32, i32
  }
  func.func @transform_3(%arg0: i32) -> (i32, i32) {
    %c0_i32 = arith.constant 0 : i32
    %c0_i32_0 = arith.constant 0 : i32
    return %arg0, %c0_i32 : i32, i32
  }
  func.func @transform_4(%arg0: i32) -> (i32, i32) {
    %c0_i32 = arith.constant 0 : i32
    %c0_i32_0 = arith.constant 0 : i32
    return %arg0, %c0_i32 : i32, i32
  }
}

</mosaic_0001>

<llo_original>
// kernel: basic_block_forward.5
$region0: #{basic_block_forward.5}
  #allocation0 [shape = 'u32[]', space=smem, size = 0x4, offset = 0x4, fixed_abs, tag = 'smem constant byte address 0x4 - core index']
  #allocation1 [shape = 'u32[72,128]{1,0:T(1,128)}', space=vmem, size = 0x9000, scoped, tag = 'internal scratch']
  %s0 = inlined_call_operand.vmem [shape: f32[512,128], index: 0, kind: input, shape index: {}]
  %s1 = inlined_call_operand.vmem [shape: f32[1,128], index: 1, kind: input, shape index: {}]
  %s2 = inlined_call_operand.vmem [shape: f32[1,128], index: 2, kind: input, shape index: {}]
  %s3 = inlined_call_operand.vmem [shape: f32[512,128], index: 3, kind: output, shape index: {}]
  %s4 = sld [smem:[#allocation0]]
  $region45: #{basic_block_forward.5} parent=0
    _
  %s6 = ssub.s32 1, %s4
  %s7 = scalar_select 0, %s6, %s4
  loop: start=0, step=1, limit=6
  $region2: #{basic_block_forward.5} parent=0 // loop_pre_header
    _
  $region3: #{basic_block_forward.5} parent=0 // loop_header
    %s9 = sphi 0, %s13
    %p10 = scmp.ge.s32.totalorder %s9, 6
    %s19 = sphi 0, %s21
    %s22 = sphi 0, %s19
    %s23 = sphi 0, %s22
    %s39 = sphi 0, %s23
    %s43 = sphi 0, %s43
    %s45 = sphi 0, %s43
    %s46 = sphi 0, %s45
    %s60 = sphi 0, %s46
    %s64 = sphi 0, %s64
    %s66 = sphi 0, %s64
    %s67 = sphi 0, %s66
    %s81 = sphi 0, %s67
    %s87 = sphi 0, %s89
    %s90 = sphi 0, %s87
    %s91 = sphi 0, %s90
    %s107 = sphi 0, %s91
  $region4: #{basic_block_forward.5} parent=0 // loop_header_branch
    %12 = sbr.rel (%p10) target = $region8
  $region5: #{basic_block_forward.5} parent=0 // loop_body
    %s14 = ssub.s32 %s9, 1
    %s15 = ssub.s32 %s9, 2
    %s16 = sadd.s32 %s9, 1
    %s17 = ssub.s32 %s9, %s16
    %p18 = scmp.eq.s32.totalorder %s17, 0
    %s20 = sadd.s32 %s19, 1
    %s21 = scalar_select %p18, %s19, %s20
    %p24 = pneg %p18
    %p25 = scmp.eq.s32.totalorder %s9, 3
    %p26 = por %p24, %p25
    %p27 = scmp.ne.s32.totalorder %s19, %s22
    %p28 = scmp.eq.s32.totalorder %s9, 0
    %p29 = por %p27, %p28
    %p30 = scmp.ne.s32.totalorder %s19, %s22
    %p31 = scmp.eq.s32.totalorder %s14, 3
    %p32 = por %p30, %p31
    %p33 = scmp.ne.s32.totalorder %s22, %s23
    %p34 = scmp.eq.s32.totalorder %s14, 0
    %p35 = por %p33, %p34
    %p36 = scmp.ne.s32.totalorder %s22, %s23
    %p37 = scmp.eq.s32.totalorder %s15, 3
    %p38 = por %p36, %p37
    %p40 = scmp.ne.s32.totalorder %s23, %s39
    %p41 = scmp.eq.s32.totalorder %s15, 0
    %p42 = por %p40, %p41
    %s44 = sadd.s32 %s43, 1
    %p47 = scmp.eq.s32.totalorder %s9, 3
    %p48 = scmp.ne.s32.totalorder %s43, %s45
    %p49 = scmp.eq.s32.totalorder %s9, 0
    %p50 = por %p48, %p49
    %p51 = scmp.ne.s32.totalorder %s43, %s45
    %p52 = scmp.eq.s32.totalorder %s14, 3
    %p53 = por %p51, %p52
    %p54 = scmp.ne.s32.totalorder %s45, %s46
    %p55 = scmp.eq.s32.totalorder %s14, 0
    %p56 = por %p54, %p55
    %p57 = scmp.ne.s32.totalorder %s45, %s46
    %p58 = scmp.eq.s32.totalorder %s15, 3
    %p59 = por %p57, %p58
    %p61 = scmp.ne.s32.totalorder %s46, %s60
    %p62 = scmp.eq.s32.totalorder %s15, 0
    %p63 = por %p61, %p62
    %s65 = sadd.s32 %s64, 1
    %p68 = scmp.eq.s32.totalorder %s9, 3
    %p69 = scmp.ne.s32.totalorder %s64, %s66
    %p70 = scmp.eq.s32.totalorder %s9, 0
    %p71 = por %p69, %p70
    %p72 = scmp.ne.s32.totalorder %s64, %s66
    %p73 = scmp.eq.s32.totalorder %s14, 3
    %p74 = por %p72, %p73
    %p75 = scmp.ne.s32.totalorder %s66, %s67
    %p76 = scmp.eq.s32.totalorder %s14, 0
    %p77 = por %p75, %p76
    %p78 = scmp.ne.s32.totalorder %s66, %s67
    %p79 = scmp.eq.s32.totalorder %s15, 3
    %p80 = por %p78, %p79
    %p82 = scmp.ne.s32.totalorder %s67, %s81
    %p83 = scmp.eq.s32.totalorder %s15, 0
    %p84 = por %p82, %p83
    %s85 = ssub.s32 %s9, %s16
    %p86 = scmp.eq.s32.totalorder %s85, 0
    %s88 = sadd.s32 %s87, 1
    %s89 = scalar_select %p86, %s87, %s88
    %p92 = pneg %p86
    %p93 = scmp.eq.s32.totalorder %s9, 3
    %p94 = por %p92, %p93
    %p95 = scmp.ne.s32.totalorder %s87, %s90
    %p96 = scmp.eq.s32.totalorder %s9, 0
    %p97 = por %p95, %p96
    %p98 = scmp.ne.s32.totalorder %s87, %s90
    %p99 = scmp.eq.s32.totalorder %s14, 3
    %p100 = por %p98, %p99
    %p101 = scmp.ne.s32.totalorder %s90, %s91
    %p102 = scmp.eq.s32.totalorder %s14, 0
    %p103 = por %p101, %p102
    %p104 = scmp.ne.s32.totalorder %s90, %s91
    %p105 = scmp.eq.s32.totalorder %s15, 3
    %p106 = por %p104, %p105
    %p108 = scmp.ne.s32.totalorder %s91, %s107
    %p109 = scmp.eq.s32.totalorder %s15, 0
    %p110 = por %p108, %p109
    %p111 = scmp.le.s32.totalorder 1, %s9
    %p112 = scmp.lt.s32.totalorder %s9, 5
    %p113 = pnand %p111, %p112
    %p114 = pneg %p113
    // Predicated region
    $region9: #{basic_block_forward.5} parent=5 // pred_check
      _
    $region10: #{basic_block_forward.5} parent=5 // pred_check_branch
      %116 = sbr.rel (%p113) target = $region12
    $region11: #{basic_block_forward.5} parent=5 // pred_region
      %s117 = ssub.s32 %s9, 1
      // Predicated region
      $region13: #{basic_block_forward.5} parent=11 // pred_check
        %p118 = pneg %p56
      $region14: #{basic_block_forward.5} parent=11 // pred_check_branch
        %120 = sbr.rel (%p118) target = $region16
      $region15: #{basic_block_forward.5} parent=11 // pred_region
        _
      $region16: #{basic_block_forward.5} parent=11 // pred_fallthru
        _
      // Predicated region
      $region17: #{basic_block_forward.5} parent=11 // pred_check
        %p121 = pneg %p77
      $region18: #{basic_block_forward.5} parent=11 // pred_check_branch
        %123 = sbr.rel (%p121) target = $region20
      $region19: #{basic_block_forward.5} parent=11 // pred_region
        _
      $region20: #{basic_block_forward.5} parent=11 // pred_fallthru
        _
    $region12: #{basic_block_forward.5} parent=5 // pred_fallthru
      _
    %p124 = scmp.lt.s32.totalorder %s9, 4
    // Predicated region
    $region21: #{basic_block_forward.5} parent=5 // pred_check
      %p125 = pneg %p124
    $region22: #{basic_block_forward.5} parent=5 // pred_check_branch
      %127 = sbr.rel (%p125) target = $region24
    $region23: #{basic_block_forward.5} parent=5 // pred_region
      // Predicated region
      $region25: #{basic_block_forward.5} parent=23 // pred_check
        %p128 = pneg %p29
      $region26: #{basic_block_forward.5} parent=23 // pred_check_branch
        %130 = sbr.rel (%p128) target = $region28
      $region27: #{basic_block_forward.5} parent=23 // pred_region
        %s131 = smul.u32 16, %s9
        %p132 = scmp.lt.s32.totalorder %s131, 63
        %s133 = scalar_select %p132, %s131, 63
        %s134 = smul.addr %s133, 8
        %s135 = scalar_lea.vmem %s0, %s134
        %s136 = smul.u32 16, %s9
      $region28: #{basic_block_forward.5} parent=23 // pred_fallthru
        _
    $region24: #{basic_block_forward.5} parent=5 // pred_fallthru
      _
    %p137 = scmp.le.s32.totalorder 1, %s9
    %p138 = scmp.lt.s32.totalorder %s9, 5
    %p139 = pnand %p137, %p138
    %p140 = pneg %p139
    // Predicated region
    $region29: #{basic_block_forward.5} parent=5 // pred_check
      _
    $region30: #{basic_block_forward.5} parent=5 // pred_check_branch
      %142 = sbr.rel (%p139) target = $region32
    $region31: #{basic_block_forward.5} parent=5 // pred_region
      %s143 = ssub.s32 %s9, 1
      %s144 = smul.u32 16, %s14
      %p145 = scmp.lt.s32.totalorder %s144, 63
      %s146 = scalar_select %p145, %s144, 63
      %s147 = smul.addr %s146, 8
      %s148 = scalar_lea.vmem %s0, %s147
      %p149 = pneg %p35
      %p150 = pneg %p32
      %p151 = pneg %p56
      %p152 = pneg %p53
      %p153 = pneg %p77
      %p154 = pneg %p74
      %p155 = pneg %p103
      %p156 = pneg %p100
      %s157 = smul.u32 16, %s14
      %p158 = scmp.lt.s32.totalorder %s157, 63
      %s159 = scalar_select %p158, %s157, 63
      %s160 = smul.addr %s159, 8
      %s161 = scalar_lea.vmem %s3, %s160
      %s162 = smul.u32 16, %s14
      %p163 = scmp.lt.s32.totalorder %s162, 63
      %s164 = scalar_select %p163, %s162, 63
      %s165 = smul.addr %s164, 8
      %s166 = scalar_lea.vmem %s0, %s165
      %s167 = smul.u32 16, %s14
      %s168 = smul.u32 16, %s14
      %p169 = scmp.lt.s32.totalorder %s168, 63
      %s170 = scalar_select %p169, %s168, 63
      %s171 = smul.addr %s170, 8
      %s172 = scalar_lea.vmem %s3, %s171
      %s173 = smul.u32 16, %s14
      %v174 = vld [vmem:[%s166] sm:$0xff]
      %v175 = vld [vmem:[%s166 + $0x8] sm:$0xff]
      %v176 = vld [vmem:[%s166 + $0x10] sm:$0xff]
      %v177 = vld [vmem:[%s166 + $0x18] sm:$0xff]
      %v178 = vld [vmem:[%s166 + $0x20] sm:$0xff]
      %v179 = vld [vmem:[%s166 + $0x28] sm:$0xff]
      %v180 = vld [vmem:[%s166 + $0x30] sm:$0xff]
      %v181 = vld [vmem:[%s166 + $0x38] sm:$0xff]
      %v182 = vld [vmem:[%s166 + $0x40] sm:$0xff]
      %v183 = vld [vmem:[%s166 + $0x48] sm:$0xff]
      %v184 = vld [vmem:[%s166 + $0x50] sm:$0xff]
      %v185 = vld [vmem:[%s166 + $0x58] sm:$0xff]
      %v186 = vld [vmem:[%s166 + $0x60] sm:$0xff]
      %v187 = vld [vmem:[%s166 + $0x68] sm:$0xff]
      %v188 = vld [vmem:[%s166 + $0x70] sm:$0xff]
      %v189 = vld [vmem:[%s166 + $0x78] sm:$0xff]
      %v190 = vld [vmem:[%s1] sm:$0x1]
      %v192 = vperm.slane %v190, 0
      %v194 = vmul.f32 %v174, %v192
      %v195 = vmul.f32 %v175, %v192
      %v196 = vmul.f32 %v176, %v192
      %v197 = vmul.f32 %v177, %v192
      %v198 = vmul.f32 %v178, %v192
      %v199 = vmul.f32 %v179, %v192
      %v200 = vmul.f32 %v180, %v192
      %v201 = vmul.f32 %v181, %v192
      %v202 = vmul.f32 %v182, %v192
      %v203 = vmul.f32 %v183, %v192
      %v204 = vmul.f32 %v184, %v192
      %v205 = vmul.f32 %v185, %v192
      %v206 = vmul.f32 %v186, %v192
      %v207 = vmul.f32 %v187, %v192
      %v208 = vmul.f32 %v188, %v192
      %v209 = vmul.f32 %v189, %v192
      %v210 = vld [vmem:[%s2] sm:$0x1]
      %v212 = vperm.slane %v210, 0
      %v214 = vadd.f32 %v194, %v212
      %v215 = vadd.f32 %v195, %v212
      %v216 = vadd.f32 %v196, %v212
      %v217 = vadd.f32 %v197, %v212
      %v218 = vadd.f32 %v198, %v212
      %v219 = vadd.f32 %v199, %v212
      %v220 = vadd.f32 %v200, %v212
      %v221 = vadd.f32 %v201, %v212
      %v222 = vadd.f32 %v202, %v212
      %v223 = vadd.f32 %v203, %v212
      %v224 = vadd.f32 %v204, %v212
      %v225 = vadd.f32 %v205, %v212
      %v226 = vadd.f32 %v206, %v212
      %v227 = vadd.f32 %v207, %v212
      %v228 = vadd.f32 %v208, %v212
      %v229 = vadd.f32 %v209, %v212
      %v230 = vmax.f32 %v214, 0.0
      %v231 = vmax.f32 %v215, 0.0
      %v232 = vmax.f32 %v216, 0.0
      %v233 = vmax.f32 %v217, 0.0
      %v234 = vmax.f32 %v218, 0.0
      %v235 = vmax.f32 %v219, 0.0
      %v236 = vmax.f32 %v220, 0.0
      %v237 = vmax.f32 %v221, 0.0
      %v238 = vmax.f32 %v222, 0.0
      %v239 = vmax.f32 %v223, 0.0
      %v240 = vmax.f32 %v224, 0.0
      %v241 = vmax.f32 %v225, 0.0
      %v242 = vmax.f32 %v226, 0.0
      %v243 = vmax.f32 %v227, 0.0
      %v244 = vmax.f32 %v228, 0.0
      %v245 = vmax.f32 %v229, 0.0
      %246 = vst [vmem:[%s172] sm:$0xff] %v230
      %247 = vst [vmem:[%s172 + $0x8] sm:$0xff] %v231
      %248 = vst [vmem:[%s172 + $0x10] sm:$0xff] %v232
      %249 = vst [vmem:[%s172 + $0x18] sm:$0xff] %v233
      %250 = vst [vmem:[%s172 + $0x20] sm:$0xff] %v234
      %251 = vst [vmem:[%s172 + $0x28] sm:$0xff] %v235
      %252 = vst [vmem:[%s172 + $0x30] sm:$0xff] %v236
      %253 = vst [vmem:[%s172 + $0x38] sm:$0xff] %v237
      %254 = vst [vmem:[%s172 + $0x40] sm:$0xff] %v238
      %255 = vst [vmem:[%s172 + $0x48] sm:$0xff] %v239
      %256 = vst [vmem:[%s172 + $0x50] sm:$0xff] %v240
      %257 = vst [vmem:[%s172 + $0x58] sm:$0xff] %v241
      %258 = vst [vmem:[%s172 + $0x60] sm:$0xff] %v242
      %259 = vst [vmem:[%s172 + $0x68] sm:$0xff] %v243
      %260 = vst [vmem:[%s172 + $0x70] sm:$0xff] %v244
      %261 = vst [vmem:[%s172 + $0x78] sm:$0xff] %v245
      %s262 = smul.u32 16, %s14
      %p263 = scmp.lt.s32.totalorder %s262, 63
      %s264 = scalar_select %p263, %s262, 63
      %s265 = smul.addr %s264, 8
      %s266 = scalar_lea.vmem %s3, %s265
      // Predicated region
      $region33: #{basic_block_forward.5} parent=31 // pred_check
        %p267 = pneg %p100
      $region34: #{basic_block_forward.5} parent=31 // pred_check_branch
        %269 = sbr.rel (%p267) target = $region36
      $region35: #{basic_block_forward.5} parent=31 // pred_region
        %s270 = smul.u32 16, %s14
      $region36: #{basic_block_forward.5} parent=31 // pred_fallthru
        _
    $region32: #{basic_block_forward.5} parent=5 // pred_fallthru
      _
    %p271 = scmp.le.s32.totalorder 2, %s9
    // Predicated region
    $region37: #{basic_block_forward.5} parent=5 // pred_check
      %p272 = pneg %p271
    $region38: #{basic_block_forward.5} parent=5 // pred_check_branch
      %274 = sbr.rel (%p272) target = $region40
    $region39: #{basic_block_forward.5} parent=5 // pred_region
      %s275 = ssub.s32 %s9, 2
      // Predicated region
      $region41: #{basic_block_forward.5} parent=39 // pred_check
        %p276 = pneg %p106
      $region42: #{basic_block_forward.5} parent=39 // pred_check_branch
        %278 = sbr.rel (%p276) target = $region44
      $region43: #{basic_block_forward.5} parent=39 // pred_region
        %s279 = smul.u32 16, %s15
        %p280 = scmp.lt.s32.totalorder %s279, 63
        %s281 = scalar_select %p280, %s279, 63
        %s282 = smul.addr %s281, 8
        %s283 = scalar_lea.vmem %s3, %s282
      $region44: #{basic_block_forward.5} parent=39 // pred_fallthru
        _
    $region40: #{basic_block_forward.5} parent=5 // pred_fallthru
      _
  $region6: #{basic_block_forward.5} parent=0 // loop_footer
    %s13 = sadd.s32 1, %s9
  $region7: #{basic_block_forward.5} parent=0 // loop_footer_branch
    %8 = sbr.rel target = $region3
  $region8: #{basic_block_forward.5} parent=0 // loop_exit
    _

// kernel: basic_block_forward.4
$region0: #{basic_block_forward.4}
  #allocation0 [shape = 'u32[]', space=smem, size = 0x4, offset = 0x4, fixed_abs, tag = 'smem constant byte address 0x4 - core index']
  #allocation1 [shape = 'u32[72,128]{1,0:T(1,128)}', space=vmem, size = 0x9000, scoped, tag = 'internal scratch']
  %s0 = inlined_call_operand.vmem [shape: bf16[512,128], index: 0, kind: input, shape index: {}]
  %s1 = inlined_call_operand.vmem [shape: bf16[128,128], index: 1, kind: input, shape index: {}]
  %s2 = inlined_call_operand.vmem [shape: f32[512,128], index: 2, kind: output, shape index: {0}]
  %s3 = inlined_call_operand.vmem [shape: f32[4,2,128], index: 3, kind: output, shape index: {1}]
  %4 = xla_tuple %s2, %s3
  %s5 = sld [smem:[#allocation0]]
  $region49: #{basic_block_forward.4} parent=0
    _
  %s7 = ssub.s32 1, %s5
  %s8 = scalar_select 0, %s7, %s5
  loop: start=0, step=1, limit=6
  $region2: #{basic_block_forward.4} parent=0 // loop_pre_header
    _
  $region3: #{basic_block_forward.4} parent=0 // loop_header
    %s10 = sphi 0, %s14
    %p11 = scmp.ge.s32.totalorder %s10, 6
    %s20 = sphi 0, %s22
    %s23 = sphi 0, %s20
    %s24 = sphi 0, %s23
    %s40 = sphi 0, %s24
    %s44 = sphi 0, %s44
    %s46 = sphi 0, %s44
    %s47 = sphi 0, %s46
    %s61 = sphi 0, %s47
    %s67 = sphi 0, %s69
    %s70 = sphi 0, %s67
    %s71 = sphi 0, %s70
    %s87 = sphi 0, %s71
    %s93 = sphi 0, %s95
    %s96 = sphi 0, %s93
    %s97 = sphi 0, %s96
    %s113 = sphi 0, %s97
  $region4: #{basic_block_forward.4} parent=0 // loop_header_branch
    %13 = sbr.rel (%p11) target = $region8
  $region5: #{basic_block_forward.4} parent=0 // loop_body
    %s15 = ssub.s32 %s10, 1
    %s16 = ssub.s32 %s10, 2
    %s17 = sadd.s32 %s10, 1
    %s18 = ssub.s32 %s10, %s17
    %p19 = scmp.eq.s32.totalorder %s18, 0
    %s21 = sadd.s32 %s20, 1
    %s22 = scalar_select %p19, %s20, %s21
    %p25 = pneg %p19
    %p26 = scmp.eq.s32.totalorder %s10, 3
    %p27 = por %p25, %p26
    %p28 = scmp.ne.s32.totalorder %s20, %s23
    %p29 = scmp.eq.s32.totalorder %s10, 0
    %p30 = por %p28, %p29
    %p31 = scmp.ne.s32.totalorder %s20, %s23
    %p32 = scmp.eq.s32.totalorder %s15, 3
    %p33 = por %p31, %p32
    %p34 = scmp.ne.s32.totalorder %s23, %s24
    %p35 = scmp.eq.s32.totalorder %s15, 0
    %p36 = por %p34, %p35
    %p37 = scmp.ne.s32.totalorder %s23, %s24
    %p38 = scmp.eq.s32.totalorder %s16, 3
    %p39 = por %p37, %p38
    %p41 = scmp.ne.s32.totalorder %s24, %s40
    %p42 = scmp.eq.s32.totalorder %s16, 0
    %p43 = por %p41, %p42
    %s45 = sadd.s32 %s44, 1
    %p48 = scmp.eq.s32.totalorder %s10, 3
    %p49 = scmp.ne.s32.totalorder %s44, %s46
    %p50 = scmp.eq.s32.totalorder %s10, 0
    %p51 = por %p49, %p50
    %p52 = scmp.ne.s32.totalorder %s44, %s46
    %p53 = scmp.eq.s32.totalorder %s15, 3
    %p54 = por %p52, %p53
    %p55 = scmp.ne.s32.totalorder %s46, %s47
    %p56 = scmp.eq.s32.totalorder %s15, 0
    %p57 = por %p55, %p56
    %p58 = scmp.ne.s32.totalorder %s46, %s47
    %p59 = scmp.eq.s32.totalorder %s16, 3
    %p60 = por %p58, %p59
    %p62 = scmp.ne.s32.totalorder %s47, %s61
    %p63 = scmp.eq.s32.totalorder %s16, 0
    %p64 = por %p62, %p63
    %s65 = ssub.s32 %s10, %s17
    %p66 = scmp.eq.s32.totalorder %s65, 0
    %s68 = sadd.s32 %s67, 1
    %s69 = scalar_select %p66, %s67, %s68
    %p72 = pneg %p66
    %p73 = scmp.eq.s32.totalorder %s10, 3
    %p74 = por %p72, %p73
    %p75 = scmp.ne.s32.totalorder %s67, %s70
    %p76 = scmp.eq.s32.totalorder %s10, 0
    %p77 = por %p75, %p76
    %p78 = scmp.ne.s32.totalorder %s67, %s70
    %p79 = scmp.eq.s32.totalorder %s15, 3
    %p80 = por %p78, %p79
    %p81 = scmp.ne.s32.totalorder %s70, %s71
    %p82 = scmp.eq.s32.totalorder %s15, 0
    %p83 = por %p81, %p82
    %p84 = scmp.ne.s32.totalorder %s70, %s71
    %p85 = scmp.eq.s32.totalorder %s16, 3
    %p86 = por %p84, %p85
    %p88 = scmp.ne.s32.totalorder %s71, %s87
    %p89 = scmp.eq.s32.totalorder %s16, 0
    %p90 = por %p88, %p89
    %s91 = ssub.s32 %s10, %s17
    %p92 = scmp.eq.s32.totalorder %s91, 0
    %s94 = sadd.s32 %s93, 1
    %s95 = scalar_select %p92, %s93, %s94
    %p98 = pneg %p92
    %p99 = scmp.eq.s32.totalorder %s10, 3
    %p100 = por %p98, %p99
    %p101 = scmp.ne.s32.totalorder %s93, %s96
    %p102 = scmp.eq.s32.totalorder %s10, 0
    %p103 = por %p101, %p102
    %p104 = scmp.ne.s32.totalorder %s93, %s96
    %p105 = scmp.eq.s32.totalorder %s15, 3
    %p106 = por %p104, %p105
    %p107 = scmp.ne.s32.totalorder %s96, %s97
    %p108 = scmp.eq.s32.totalorder %s15, 0
    %p109 = por %p107, %p108
    %p110 = scmp.ne.s32.totalorder %s96, %s97
    %p111 = scmp.eq.s32.totalorder %s16, 3
    %p112 = por %p110, %p111
    %p114 = scmp.ne.s32.totalorder %s97, %s113
    %p115 = scmp.eq.s32.totalorder %s16, 0
    %p116 = por %p114, %p115
    %p117 = scmp.le.s32.totalorder 1, %s10
    %p118 = scmp.lt.s32.totalorder %s10, 5
    %p119 = pnand %p117, %p118
    %p120 = pneg %p119
    // Predicated region
    $region9: #{basic_block_forward.4} parent=5 // pred_check
      _
    $region10: #{basic_block_forward.4} parent=5 // pred_check_branch
      %122 = sbr.rel (%p119) target = $region12
    $region11: #{basic_block_forward.4} parent=5 // pred_region
      %s123 = ssub.s32 %s10, 1
      // Predicated region
      $region13: #{basic_block_forward.4} parent=11 // pred_check
        %p124 = pneg %p57
      $region14: #{basic_block_forward.4} parent=11 // pred_check_branch
        %126 = sbr.rel (%p124) target = $region16
      $region15: #{basic_block_forward.4} parent=11 // pred_region
        _
      $region16: #{basic_block_forward.4} parent=11 // pred_fallthru
        _
    $region12: #{basic_block_forward.4} parent=5 // pred_fallthru
      _
    %p127 = scmp.lt.s32.totalorder %s10, 4
    // Predicated region
    $region17: #{basic_block_forward.4} parent=5 // pred_check
      %p128 = pneg %p127
    $region18: #{basic_block_forward.4} parent=5 // pred_check_branch
      %130 = sbr.rel (%p128) target = $region20
    $region19: #{basic_block_forward.4} parent=5 // pred_region
      // Predicated region
      $region21: #{basic_block_forward.4} parent=19 // pred_check
        %p131 = pneg %p30
      $region22: #{basic_block_forward.4} parent=19 // pred_check_branch
        %133 = sbr.rel (%p131) target = $region24
      $region23: #{basic_block_forward.4} parent=19 // pred_region
        %s134 = smul.u32 16, %s10
        %p135 = scmp.lt.s32.totalorder %s134, 63
        %s136 = scalar_select %p135, %s134, 63
        %s137 = smul.addr %s136, 4
        %s138 = scalar_lea.vmem %s0, %s137
        %s139 = smul.u32 16, %s10
      $region24: #{basic_block_forward.4} parent=19 // pred_fallthru
        _
    $region20: #{basic_block_forward.4} parent=5 // pred_fallthru
      _
    %p140 = scmp.le.s32.totalorder 1, %s10
    %p141 = scmp.lt.s32.totalorder %s10, 5
    %p142 = pnand %p140, %p141
    %p143 = pneg %p142
    // Predicated region
    $region25: #{basic_block_forward.4} parent=5 // pred_check
      _
    $region26: #{basic_block_forward.4} parent=5 // pred_check_branch
      %145 = sbr.rel (%p142) target = $region28
    $region27: #{basic_block_forward.4} parent=5 // pred_region
      %s146 = ssub.s32 %s10, 1
      %s147 = smul.u32 16, %s15
      %p148 = scmp.lt.s32.totalorder %s147, 63
      %s149 = scalar_select %p148, %s147, 63
      %s150 = smul.addr %s149, 4
      %s151 = scalar_lea.vmem %s0, %s150
      %p152 = pneg %p36
      %p153 = pneg %p33
      %p154 = pneg %p57
      %p155 = pneg %p54
      %p156 = pneg %p83
      %p157 = pneg %p80
      %s158 = smul.u32 16, %s15
      %p159 = scmp.lt.s32.totalorder %s158, 63
      %s160 = scalar_select %p159, %s158, 63
      %s161 = smul.addr %s160, 8
      %s162 = scalar_lea.vmem %s2, %s161
      %p163 = pneg %p109
      %p164 = pneg %p106
      %p165 = scmp.lt.s32.totalorder %s15, 3
      %s166 = scalar_select %p165, %s15, 3
      %s167 = smul.addr %s166, 2
      %s168 = scalar_lea.vmem %s3, %s167
      %s169 = smul.u32 16, %s15
      %p170 = scmp.lt.s32.totalorder %s169, 63
      %s171 = scalar_select %p170, %s169, 63
      %s172 = smul.addr %s171, 4
      %s173 = scalar_lea.vmem %s0, %s172
      %s174 = smul.u32 16, %s15
      %s175 = smul.u32 16, %s15
      %p176 = scmp.lt.s32.totalorder %s175, 63
      %s177 = scalar_select %p176, %s175, 63
      %s178 = smul.addr %s177, 8
      %s179 = scalar_lea.vmem %s2, %s178
      %s180 = smul.u32 16, %s15
      %p181 = scmp.lt.s32.totalorder %s15, 3
      %s182 = scalar_select %p181, %s15, 3
      %s183 = smul.addr %s182, 2
      %s184 = scalar_lea.vmem %s3, %s183
      %v185 = vld [vmem:[%s173] sm:$0xf]
      %v186 = vld [vmem:[%s173 + $0x4] sm:$0xf]
      %v187 = vld [vmem:[%s173 + $0x8] sm:$0xf]
      %v188 = vld [vmem:[%s173 + $0xc] sm:$0xf]
      %v189 = vld [vmem:[%s173 + $0x10] sm:$0xf]
      %v190 = vld [vmem:[%s173 + $0x14] sm:$0xf]
      %v191 = vld [vmem:[%s173 + $0x18] sm:$0xf]
      %v192 = vld [vmem:[%s173 + $0x1c] sm:$0xf]
      %v193 = vld [vmem:[%s173 + $0x20] sm:$0xf]
      %v194 = vld [vmem:[%s173 + $0x24] sm:$0xf]
      %v195 = vld [vmem:[%s173 + $0x28] sm:$0xf]
      %v196 = vld [vmem:[%s173 + $0x2c] sm:$0xf]
      %v197 = vld [vmem:[%s173 + $0x30] sm:$0xf]
      %v198 = vld [vmem:[%s173 + $0x34] sm:$0xf]
      %v199 = vld [vmem:[%s173 + $0x38] sm:$0xf]
      %v200 = vld [vmem:[%s173 + $0x3c] sm:$0xf]
      %v201 = vld [vmem:[%s1] sm:$0xf]
      %v202 = vld [vmem:[%s1 + $0x4] sm:$0xf]
      %v203 = vld [vmem:[%s1 + $0x8] sm:$0xf]
      %v204 = vld [vmem:[%s1 + $0xc] sm:$0xf]
      %v205 = vld [vmem:[%s1 + $0x10] sm:$0xf]
      %v206 = vld [vmem:[%s1 + $0x14] sm:$0xf]
      %v207 = vld [vmem:[%s1 + $0x18] sm:$0xf]
      %v208 = vld [vmem:[%s1 + $0x1c] sm:$0xf]
      %v209 = vld [vmem:[%s1 + $0x20] sm:$0xf]
      %v210 = vld [vmem:[%s1 + $0x24] sm:$0xf]
      %v211 = vld [vmem:[%s1 + $0x28] sm:$0xf]
      %v212 = vld [vmem:[%s1 + $0x2c] sm:$0xf]
      %v213 = vld [vmem:[%s1 + $0x30] sm:$0xf]
      %v214 = vld [vmem:[%s1 + $0x34] sm:$0xf]
      %v215 = vld [vmem:[%s1 + $0x38] sm:$0xf]
      %v216 = vld [vmem:[%s1 + $0x3c] sm:$0xf]
      %v233 = vunpack.c.l.b16 %v185
      %v234 = vunpack.c.l.b16 %v186
      %v235 = vunpack.c.l.b16 %v187
      %v236 = vunpack.c.l.b16 %v188
      %v237 = vunpack.c.l.b16 %v189
      %v238 = vunpack.c.l.b16 %v190
      %v239 = vunpack.c.l.b16 %v191
      %v240 = vunpack.c.l.b16 %v192
      %v241 = vunpack.c.l.b16 %v193
      %v242 = vunpack.c.l.b16 %v194
      %v243 = vunpack.c.l.b16 %v195
      %v244 = vunpack.c.l.b16 %v196
      %v245 = vunpack.c.l.b16 %v197
      %v246 = vunpack.c.l.b16 %v198
      %v247 = vunpack.c.l.b16 %v199
      %v248 = vunpack.c.l.b16 %v200
      %v249 = vpack.c.b16 %v234, %v233
      %v250 = vpack.c.b16 %v236, %v235
      %v251 = vpack.c.b16 %v238, %v237
      %v252 = vpack.c.b16 %v240, %v239
      %v253 = vpack.c.b16 %v242, %v241
      %v254 = vpack.c.b16 %v244, %v243
      %v255 = vpack.c.b16 %v246, %v245
      %v256 = vpack.c.b16 %v248, %v247
      %v281 = vunpack.c.l.b16 %v201
      %v282 = vunpack.c.l.b16 %v202
      %v283 = vunpack.c.l.b16 %v203
      %v284 = vunpack.c.l.b16 %v204
      %v285 = vunpack.c.l.b16 %v205
      %v286 = vunpack.c.l.b16 %v206
      %v287 = vunpack.c.l.b16 %v207
      %v288 = vunpack.c.l.b16 %v208
      %v289 = vunpack.c.l.b16 %v209
      %v290 = vunpack.c.l.b16 %v210
      %v291 = vunpack.c.l.b16 %v211
      %v292 = vunpack.c.l.b16 %v212
      %v293 = vunpack.c.l.b16 %v213
      %v294 = vunpack.c.l.b16 %v214
      %v295 = vunpack.c.l.b16 %v215
      %v296 = vunpack.c.l.b16 %v216
      %v297 = vpack.c.b16 %v282, %v281
      %v298 = vpack.c.b16 %v284, %v283
      %v299 = vpack.c.b16 %v286, %v285
      %v300 = vpack.c.b16 %v288, %v287
      %v301 = vpack.c.b16 %v290, %v289
      %v302 = vpack.c.b16 %v292, %v291
      %v303 = vpack.c.b16 %v294, %v293
      %v304 = vpack.c.b16 %v296, %v295
      %313 = vmatpush.bf16.msra.mxu0 %v304
      %314 = vmatpush.bf16.msra.mxu0 %v303
      %315 = vmatpush.bf16.msra.mxu0 %v302
      %316 = vmatpush.bf16.msra.mxu0 %v301
      %317 = vmatpush.bf16.msra.mxu0 %v300
      %318 = vmatpush.bf16.msra.mxu0 %v299
      %319 = vmatpush.bf16.msra.mxu0 %v298
      %320 = vmatpush.bf16.msra.mxu0 %v297
      %321 = vmatmul.bf16.gmra.mxu0 %v249
      %v322 = vpop.f32.mrf.mxu0
      %v323 = vadd.f32 0.0, %v322
      %v324 = vpop.f32.mrf.mxu0
      %v325 = vadd.f32 0.0, %v324
      %326 = vmatmul.bf16.gmra.mxu0 %v250
      %v327 = vpop.f32.mrf.mxu0
      %v328 = vadd.f32 0.0, %v327
      %v329 = vpop.f32.mrf.mxu0
      %v330 = vadd.f32 0.0, %v329
      %331 = vmatmul.bf16.gmra.mxu0 %v251
      %v332 = vpop.f32.mrf.mxu0
      %v333 = vadd.f32 0.0, %v332
      %v334 = vpop.f32.mrf.mxu0
      %v335 = vadd.f32 0.0, %v334
      %336 = vmatmul.bf16.gmra.mxu0 %v252
      %v337 = vpop.f32.mrf.mxu0
      %v338 = vadd.f32 0.0, %v337
      %v339 = vpop.f32.mrf.mxu0
      %v340 = vadd.f32 0.0, %v339
      %341 = vmatmul.bf16.gmra.mxu0 %v253
      %v342 = vpop.f32.mrf.mxu0
      %v343 = vadd.f32 0.0, %v342
      %v344 = vpop.f32.mrf.mxu0
      %v345 = vadd.f32 0.0, %v344
      %346 = vmatmul.bf16.gmra.mxu0 %v254
      %v347 = vpop.f32.mrf.mxu0
      %v348 = vadd.f32 0.0, %v347
      %v349 = vpop.f32.mrf.mxu0
      %v350 = vadd.f32 0.0, %v349
      %351 = vmatmul.bf16.gmra.mxu0 %v255
      %v352 = vpop.f32.mrf.mxu0
      %v353 = vadd.f32 0.0, %v352
      %v354 = vpop.f32.mrf.mxu0
      %v355 = vadd.f32 0.0, %v354
      %356 = vmatmul.bf16.gmra.mxu0 %v256
      %v357 = vpop.f32.mrf.mxu0
      %v358 = vadd.f32 0.0, %v357
      %v359 = vpop.f32.mrf.mxu0
      %v360 = vadd.f32 0.0, %v359
      %361 = vdwg.mxu0
      %362 = vst [vmem:[%s179] sm:$0xff] %v323
      %363 = vst [vmem:[%s179 + $0x8] sm:$0xff] %v325
      %364 = vst [vmem:[%s179 + $0x10] sm:$0xff] %v328
      %365 = vst [vmem:[%s179 + $0x18] sm:$0xff] %v330
      %366 = vst [vmem:[%s179 + $0x20] sm:$0xff] %v333
      %367 = vst [vmem:[%s179 + $0x28] sm:$0xff] %v335
      %368 = vst [vmem:[%s179 + $0x30] sm:$0xff] %v338
      %369 = vst [vmem:[%s179 + $0x38] sm:$0xff] %v340
      %370 = vst [vmem:[%s179 + $0x40] sm:$0xff] %v343
      %371 = vst [vmem:[%s179 + $0x48] sm:$0xff] %v345
      %372 = vst [vmem:[%s179 + $0x50] sm:$0xff] %v348
      %373 = vst [vmem:[%s179 + $0x58] sm:$0xff] %v350
      %374 = vst [vmem:[%s179 + $0x60] sm:$0xff] %v353
      %375 = vst [vmem:[%s179 + $0x68] sm:$0xff] %v355
      %376 = vst [vmem:[%s179 + $0x70] sm:$0xff] %v358
      %377 = vst [vmem:[%s179 + $0x78] sm:$0xff] %v360
      %v378 = vadd.f32 %v323, %v325
      %v379 = vadd.f32 %v378, %v328
      %v380 = vadd.f32 %v379, %v330
      %v381 = vadd.f32 %v380, %v333
      %v382 = vadd.f32 %v381, %v335
      %v383 = vadd.f32 %v382, %v338
      %v384 = vadd.f32 %v383, %v340
      %v385 = vadd.f32 %v384, %v343
      %v386 = vadd.f32 %v385, %v345
      %v387 = vadd.f32 %v386, %v348
      %v388 = vadd.f32 %v387, %v350
      %v389 = vadd.f32 %v388, %v353
      %v390 = vadd.f32 %v389, %v355
      %v391 = vadd.f32 %v390, %v358
      %v392 = vadd.f32 %v391, %v360
      %v393 = vrot.slane %v392, 4
      %v394 = vadd.f32 %v392, %v393
      %v395 = vrot.slane %v394, 2
      %v396 = vadd.f32 %v394, %v395
      %v397 = vrot.slane %v396, 1
      %v398 = vadd.f32 %v396, %v397
      %v399 = vmul.f32 %v323, %v323
      %v400 = vmul.f32 %v325, %v325
      %v401 = vmul.f32 %v328, %v328
      %v402 = vmul.f32 %v330, %v330
      %v403 = vmul.f32 %v333, %v333
      %v404 = vmul.f32 %v335, %v335
      %v405 = vmul.f32 %v338, %v338
      %v406 = vmul.f32 %v340, %v340
      %v407 = vmul.f32 %v343, %v343
      %v408 = vmul.f32 %v345, %v345
      %v409 = vmul.f32 %v348, %v348
      %v410 = vmul.f32 %v350, %v350
      %v411 = vmul.f32 %v353, %v353
      %v412 = vmul.f32 %v355, %v355
      %v413 = vmul.f32 %v358, %v358
      %v414 = vmul.f32 %v360, %v360
      %v415 = vadd.f32 %v399, %v400
      %v416 = vadd.f32 %v415, %v401
      %v417 = vadd.f32 %v416, %v402
      %v418 = vadd.f32 %v417, %v403
      %v419 = vadd.f32 %v418, %v404
      %v420 = vadd.f32 %v419, %v405
      %v421 = vadd.f32 %v420, %v406
      %v422 = vadd.f32 %v421, %v407
      %v423 = vadd.f32 %v422, %v408
      %v424 = vadd.f32 %v423, %v409
      %v425 = vadd.f32 %v424, %v410
      %v426 = vadd.f32 %v425, %v411
      %v427 = vadd.f32 %v426, %v412
      %v428 = vadd.f32 %v427, %v413
      %v429 = vadd.f32 %v428, %v414
      %v430 = vrot.slane %v429, 4
      %v431 = vadd.f32 %v429, %v430
      %v432 = vrot.slane %v431, 2
      %v433 = vadd.f32 %v431, %v432
      %v434 = vrot.slane %v433, 1
      %v435 = vadd.f32 %v433, %v434
      %vm436 = vcmask 1040384
      %v437 = vsel %vm436, %v398, %v435
      %438 = vst [vmem:[%s184] sm:$0x3] %v437
      %s439 = smul.u32 16, %s15
      %p440 = scmp.lt.s32.totalorder %s439, 63
      %s441 = scalar_select %p440, %s439, 63
      %s442 = smul.addr %s441, 8
      %s443 = scalar_lea.vmem %s2, %s442
      %p444 = scmp.lt.s32.totalorder %s15, 3
      %s445 = scalar_select %p444, %s15, 3
      %s446 = smul.addr %s445, 2
      %s447 = scalar_lea.vmem %s3, %s446
      // Predicated region
      $region29: #{basic_block_forward.4} parent=27 // pred_check
        %p448 = pneg %p80
      $region30: #{basic_block_forward.4} parent=27 // pred_check_branch
        %450 = sbr.rel (%p448) target = $region32
      $region31: #{basic_block_forward.4} parent=27 // pred_region
        %s451 = smul.u32 16, %s15
      $region32: #{basic_block_forward.4} parent=27 // pred_fallthru
        _
      // Predicated region
      $region33: #{basic_block_forward.4} parent=27 // pred_check
        %p452 = pneg %p106
      $region34: #{basic_block_forward.4} parent=27 // pred_check_branch
        %454 = sbr.rel (%p452) target = $region36
      $region35: #{basic_block_forward.4} parent=27 // pred_region
        _
      $region36: #{basic_block_forward.4} parent=27 // pred_fallthru
        _
    $region28: #{basic_block_forward.4} parent=5 // pred_fallthru
      _
    %p455 = scmp.le.s32.totalorder 2, %s10
    // Predicated region
    $region37: #{basic_block_forward.4} parent=5 // pred_check
      %p456 = pneg %p455
    $region38: #{basic_block_forward.4} parent=5 // pred_check_branch
      %458 = sbr.rel (%p456) target = $region40
    $region39: #{basic_block_forward.4} parent=5 // pred_region
      %s459 = ssub.s32 %s10, 2
      // Predicated region
      $region41: #{basic_block_forward.4} parent=39 // pred_check
        %p460 = pneg %p86
      $region42: #{basic_block_forward.4} parent=39 // pred_check_branch
        %462 = sbr.rel (%p460) target = $region44
      $region43: #{basic_block_forward.4} parent=39 // pred_region
        %s463 = smul.u32 16, %s16
        %p464 = scmp.lt.s32.totalorder %s463, 63
        %s465 = scalar_select %p464, %s463, 63
        %s466 = smul.addr %s465, 8
        %s467 = scalar_lea.vmem %s2, %s466
      $region44: #{basic_block_forward.4} parent=39 // pred_fallthru
        _
      // Predicated region
      $region45: #{basic_block_forward.4} parent=39 // pred_check
        %p468 = pneg %p112
      $region46: #{basic_block_forward.4} parent=39 // pred_check_branch
        %470 = sbr.rel (%p468) target = $region48
      $region47: #{basic_block_forward.4} parent=39 // pred_region
        %p471 = scmp.lt.s32.totalorder %s16, 3
        %s472 = scalar_select %p471, %s16, 3
        %s473 = smul.addr %s472, 2
        %s474 = scalar_lea.vmem %s3, %s473
      $region48: #{basic_block_forward.4} parent=39 // pred_fallthru
        _
    $region40: #{basic_block_forward.4} parent=5 // pred_fallthru
      _
  $region6: #{basic_block_forward.4} parent=0 // loop_footer
    %s14 = sadd.s32 1, %s10
  $region7: #{basic_block_forward.4} parent=0 // loop_footer_branch
    %9 = sbr.rel target = $region3
  $region8: #{basic_block_forward.4} parent=0 // loop_exit
    _

// kernel: basic_block_forward.7
$region0: #{basic_block_forward.7}
  #allocation0 [shape = 'u32[]', space=smem, size = 0x4, offset = 0x4, fixed_abs, tag = 'smem constant byte address 0x4 - core index']
  #allocation1 [shape = 'u32[72,128]{1,0:T(1,128)}', space=vmem, size = 0x9000, scoped, tag = 'internal scratch']
  %s0 = inlined_call_operand.vmem [shape: f32[512,128], index: 0, kind: input, shape index: {}]
  %s1 = inlined_call_operand.vmem [shape: f32[1,128], index: 1, kind: input, shape index: {}]
  %s2 = inlined_call_operand.vmem [shape: f32[1,128], index: 2, kind: input, shape index: {}]
  %s3 = inlined_call_operand.vmem [shape: f32[512,128], index: 3, kind: input, shape index: {}]
  %s4 = inlined_call_operand.vmem [shape: f32[512,128], index: 4, kind: output, shape index: {}]
  %s5 = sld [smem:[#allocation0]]
  $region49: #{basic_block_forward.7} parent=0
    _
  %s7 = ssub.s32 1, %s5
  %s8 = scalar_select 0, %s7, %s5
  loop: start=0, step=1, limit=6
  $region2: #{basic_block_forward.7} parent=0 // loop_pre_header
    _
  $region3: #{basic_block_forward.7} parent=0 // loop_header
    %s10 = sphi 0, %s14
    %p11 = scmp.ge.s32.totalorder %s10, 6
    %s20 = sphi 0, %s22
    %s23 = sphi 0, %s20
    %s24 = sphi 0, %s23
    %s40 = sphi 0, %s24
    %s44 = sphi 0, %s44
    %s46 = sphi 0, %s44
    %s47 = sphi 0, %s46
    %s61 = sphi 0, %s47
    %s65 = sphi 0, %s65
    %s67 = sphi 0, %s65
    %s68 = sphi 0, %s67
    %s82 = sphi 0, %s68
    %s88 = sphi 0, %s90
    %s91 = sphi 0, %s88
    %s92 = sphi 0, %s91
    %s108 = sphi 0, %s92
    %s114 = sphi 0, %s116
    %s117 = sphi 0, %s114
    %s118 = sphi 0, %s117
    %s134 = sphi 0, %s118
  $region4: #{basic_block_forward.7} parent=0 // loop_header_branch
    %13 = sbr.rel (%p11) target = $region8
  $region5: #{basic_block_forward.7} parent=0 // loop_body
    %s15 = ssub.s32 %s10, 1
    %s16 = ssub.s32 %s10, 2
    %s17 = sadd.s32 %s10, 1
    %s18 = ssub.s32 %s10, %s17
    %p19 = scmp.eq.s32.totalorder %s18, 0
    %s21 = sadd.s32 %s20, 1
    %s22 = scalar_select %p19, %s20, %s21
    %p25 = pneg %p19
    %p26 = scmp.eq.s32.totalorder %s10, 3
    %p27 = por %p25, %p26
    %p28 = scmp.ne.s32.totalorder %s20, %s23
    %p29 = scmp.eq.s32.totalorder %s10, 0
    %p30 = por %p28, %p29
    %p31 = scmp.ne.s32.totalorder %s20, %s23
    %p32 = scmp.eq.s32.totalorder %s15, 3
    %p33 = por %p31, %p32
    %p34 = scmp.ne.s32.totalorder %s23, %s24
    %p35 = scmp.eq.s32.totalorder %s15, 0
    %p36 = por %p34, %p35
    %p37 = scmp.ne.s32.totalorder %s23, %s24
    %p38 = scmp.eq.s32.totalorder %s16, 3
    %p39 = por %p37, %p38
    %p41 = scmp.ne.s32.totalorder %s24, %s40
    %p42 = scmp.eq.s32.totalorder %s16, 0
    %p43 = por %p41, %p42
    %s45 = sadd.s32 %s44, 1
    %p48 = scmp.eq.s32.totalorder %s10, 3
    %p49 = scmp.ne.s32.totalorder %s44, %s46
    %p50 = scmp.eq.s32.totalorder %s10, 0
    %p51 = por %p49, %p50
    %p52 = scmp.ne.s32.totalorder %s44, %s46
    %p53 = scmp.eq.s32.totalorder %s15, 3
    %p54 = por %p52, %p53
    %p55 = scmp.ne.s32.totalorder %s46, %s47
    %p56 = scmp.eq.s32.totalorder %s15, 0
    %p57 = por %p55, %p56
    %p58 = scmp.ne.s32.totalorder %s46, %s47
    %p59 = scmp.eq.s32.totalorder %s16, 3
    %p60 = por %p58, %p59
    %p62 = scmp.ne.s32.totalorder %s47, %s61
    %p63 = scmp.eq.s32.totalorder %s16, 0
    %p64 = por %p62, %p63
    %s66 = sadd.s32 %s65, 1
    %p69 = scmp.eq.s32.totalorder %s10, 3
    %p70 = scmp.ne.s32.totalorder %s65, %s67
    %p71 = scmp.eq.s32.totalorder %s10, 0
    %p72 = por %p70, %p71
    %p73 = scmp.ne.s32.totalorder %s65, %s67
    %p74 = scmp.eq.s32.totalorder %s15, 3
    %p75 = por %p73, %p74
    %p76 = scmp.ne.s32.totalorder %s67, %s68
    %p77 = scmp.eq.s32.totalorder %s15, 0
    %p78 = por %p76, %p77
    %p79 = scmp.ne.s32.totalorder %s67, %s68
    %p80 = scmp.eq.s32.totalorder %s16, 3
    %p81 = por %p79, %p80
    %p83 = scmp.ne.s32.totalorder %s68, %s82
    %p84 = scmp.eq.s32.totalorder %s16, 0
    %p85 = por %p83, %p84
    %s86 = ssub.s32 %s10, %s17
    %p87 = scmp.eq.s32.totalorder %s86, 0
    %s89 = sadd.s32 %s88, 1
    %s90 = scalar_select %p87, %s88, %s89
    %p93 = pneg %p87
    %p94 = scmp.eq.s32.totalorder %s10, 3
    %p95 = por %p93, %p94
    %p96 = scmp.ne.s32.totalorder %s88, %s91
    %p97 = scmp.eq.s32.totalorder %s10, 0
    %p98 = por %p96, %p97
    %p99 = scmp.ne.s32.totalorder %s88, %s91
    %p100 = scmp.eq.s32.totalorder %s15, 3
    %p101 = por %p99, %p100
    %p102 = scmp.ne.s32.totalorder %s91, %s92
    %p103 = scmp.eq.s32.totalorder %s15, 0
    %p104 = por %p102, %p103
    %p105 = scmp.ne.s32.totalorder %s91, %s92
    %p106 = scmp.eq.s32.totalorder %s16, 3
    %p107 = por %p105, %p106
    %p109 = scmp.ne.s32.totalorder %s92, %s108
    %p110 = scmp.eq.s32.totalorder %s16, 0
    %p111 = por %p109, %p110
    %s112 = ssub.s32 %s10, %s17
    %p113 = scmp.eq.s32.totalorder %s112, 0
    %s115 = sadd.s32 %s114, 1
    %s116 = scalar_select %p113, %s114, %s115
    %p119 = pneg %p113
    %p120 = scmp.eq.s32.totalorder %s10, 3
    %p121 = por %p119, %p120
    %p122 = scmp.ne.s32.totalorder %s114, %s117
    %p123 = scmp.eq.s32.totalorder %s10, 0
    %p124 = por %p122, %p123
    %p125 = scmp.ne.s32.totalorder %s114, %s117
    %p126 = scmp.eq.s32.totalorder %s15, 3
    %p127 = por %p125, %p126
    %p128 = scmp.ne.s32.totalorder %s117, %s118
    %p129 = scmp.eq.s32.totalorder %s15, 0
    %p130 = por %p128, %p129
    %p131 = scmp.ne.s32.totalorder %s117, %s118
    %p132 = scmp.eq.s32.totalorder %s16, 3
    %p133 = por %p131, %p132
    %p135 = scmp.ne.s32.totalorder %s118, %s134
    %p136 = scmp.eq.s32.totalorder %s16, 0
    %p137 = por %p135, %p136
    %p138 = scmp.le.s32.totalorder 1, %s10
    %p139 = scmp.lt.s32.totalorder %s10, 5
    %p140 = pnand %p138, %p139
    %p141 = pneg %p140
    // Predicated region
    $region9: #{basic_block_forward.7} parent=5 // pred_check
      _
    $region10: #{basic_block_forward.7} parent=5 // pred_check_branch
      %143 = sbr.rel (%p140) target = $region12
    $region11: #{basic_block_forward.7} parent=5 // pred_region
      %s144 = ssub.s32 %s10, 1
      // Predicated region
      $region13: #{basic_block_forward.7} parent=11 // pred_check
        %p145 = pneg %p57
      $region14: #{basic_block_forward.7} parent=11 // pred_check_branch
        %147 = sbr.rel (%p145) target = $region16
      $region15: #{basic_block_forward.7} parent=11 // pred_region
        _
      $region16: #{basic_block_forward.7} parent=11 // pred_fallthru
        _
      // Predicated region
      $region17: #{basic_block_forward.7} parent=11 // pred_check
        %p148 = pneg %p78
      $region18: #{basic_block_forward.7} parent=11 // pred_check_branch
        %150 = sbr.rel (%p148) target = $region20
      $region19: #{basic_block_forward.7} parent=11 // pred_region
        _
      $region20: #{basic_block_forward.7} parent=11 // pred_fallthru
        _
    $region12: #{basic_block_forward.7} parent=5 // pred_fallthru
      _
    %p151 = scmp.lt.s32.totalorder %s10, 4
    // Predicated region
    $region21: #{basic_block_forward.7} parent=5 // pred_check
      %p152 = pneg %p151
    $region22: #{basic_block_forward.7} parent=5 // pred_check_branch
      %154 = sbr.rel (%p152) target = $region24
    $region23: #{basic_block_forward.7} parent=5 // pred_region
      // Predicated region
      $region25: #{basic_block_forward.7} parent=23 // pred_check
        %p155 = pneg %p30
      $region26: #{basic_block_forward.7} parent=23 // pred_check_branch
        %157 = sbr.rel (%p155) target = $region28
      $region27: #{basic_block_forward.7} parent=23 // pred_region
        %s158 = smul.u32 16, %s10
        %p159 = scmp.lt.s32.totalorder %s158, 63
        %s160 = scalar_select %p159, %s158, 63
        %s161 = smul.addr %s160, 8
        %s162 = scalar_lea.vmem %s0, %s161
        %s163 = smul.u32 16, %s10
      $region28: #{basic_block_forward.7} parent=23 // pred_fallthru
        _
      // Predicated region
      $region29: #{basic_block_forward.7} parent=23 // pred_check
        %p164 = pneg %p98
      $region30: #{basic_block_forward.7} parent=23 // pred_check_branch
        %166 = sbr.rel (%p164) target = $region32
      $region31: #{basic_block_forward.7} parent=23 // pred_region
        %s167 = smul.u32 16, %s10
        %p168 = scmp.lt.s32.totalorder %s167, 63
        %s169 = scalar_select %p168, %s167, 63
        %s170 = smul.addr %s169, 8
        %s171 = scalar_lea.vmem %s3, %s170
        %s172 = smul.u32 16, %s10
      $region32: #{basic_block_forward.7} parent=23 // pred_fallthru
        _
    $region24: #{basic_block_forward.7} parent=5 // pred_fallthru
      _
    %p173 = scmp.le.s32.totalorder 1, %s10
    %p174 = scmp.lt.s32.totalorder %s10, 5
    %p175 = pnand %p173, %p174
    %p176 = pneg %p175
    // Predicated region
    $region33: #{basic_block_forward.7} parent=5 // pred_check
      _
    $region34: #{basic_block_forward.7} parent=5 // pred_check_branch
      %178 = sbr.rel (%p175) target = $region36
    $region35: #{basic_block_forward.7} parent=5 // pred_region
      %s179 = ssub.s32 %s10, 1
      %s180 = smul.u32 16, %s15
      %p181 = scmp.lt.s32.totalorder %s180, 63
      %s182 = scalar_select %p181, %s180, 63
      %s183 = smul.addr %s182, 8
      %s184 = scalar_lea.vmem %s0, %s183
      %p185 = pneg %p36
      %p186 = pneg %p33
      %p187 = pneg %p57
      %p188 = pneg %p54
      %p189 = pneg %p78
      %p190 = pneg %p75
      %s191 = smul.u32 16, %s15
      %p192 = scmp.lt.s32.totalorder %s191, 63
      %s193 = scalar_select %p192, %s191, 63
      %s194 = smul.addr %s193, 8
      %s195 = scalar_lea.vmem %s3, %s194
      %p196 = pneg %p104
      %p197 = pneg %p101
      %p198 = pneg %p130
      %p199 = pneg %p127
      %s200 = smul.u32 16, %s15
      %p201 = scmp.lt.s32.totalorder %s200, 63
      %s202 = scalar_select %p201, %s200, 63
      %s203 = smul.addr %s202, 8
      %s204 = scalar_lea.vmem %s4, %s203
      %s205 = smul.u32 16, %s15
      %p206 = scmp.lt.s32.totalorder %s205, 63
      %s207 = scalar_select %p206, %s205, 63
      %s208 = smul.addr %s207, 8
      %s209 = scalar_lea.vmem %s0, %s208
      %s210 = smul.u32 16, %s15
      %s211 = smul.u32 16, %s15
      %p212 = scmp.lt.s32.totalorder %s211, 63
      %s213 = scalar_select %p212, %s211, 63
      %s214 = smul.addr %s213, 8
      %s215 = scalar_lea.vmem %s3, %s214
      %s216 = smul.u32 16, %s15
      %s217 = smul.u32 16, %s15
      %p218 = scmp.lt.s32.totalorder %s217, 63
      %s219 = scalar_select %p218, %s217, 63
      %s220 = smul.addr %s219, 8
      %s221 = scalar_lea.vmem %s4, %s220
      %s222 = smul.u32 16, %s15
      %v223 = vld [vmem:[%s209] sm:$0xff]
      %v224 = vld [vmem:[%s209 + $0x8] sm:$0xff]
      %v225 = vld [vmem:[%s209 + $0x10] sm:$0xff]
      %v226 = vld [vmem:[%s209 + $0x18] sm:$0xff]
      %v227 = vld [vmem:[%s209 + $0x20] sm:$0xff]
      %v228 = vld [vmem:[%s209 + $0x28] sm:$0xff]
      %v229 = vld [vmem:[%s209 + $0x30] sm:$0xff]
      %v230 = vld [vmem:[%s209 + $0x38] sm:$0xff]
      %v231 = vld [vmem:[%s209 + $0x40] sm:$0xff]
      %v232 = vld [vmem:[%s209 + $0x48] sm:$0xff]
      %v233 = vld [vmem:[%s209 + $0x50] sm:$0xff]
      %v234 = vld [vmem:[%s209 + $0x58] sm:$0xff]
      %v235 = vld [vmem:[%s209 + $0x60] sm:$0xff]
      %v236 = vld [vmem:[%s209 + $0x68] sm:$0xff]
      %v237 = vld [vmem:[%s209 + $0x70] sm:$0xff]
      %v238 = vld [vmem:[%s209 + $0x78] sm:$0xff]
      %v239 = vld [vmem:[%s1] sm:$0x1]
      %v241 = vperm.slane %v239, 0
      %v243 = vmul.f32 %v223, %v241
      %v244 = vmul.f32 %v224, %v241
      %v245 = vmul.f32 %v225, %v241
      %v246 = vmul.f32 %v226, %v241
      %v247 = vmul.f32 %v227, %v241
      %v248 = vmul.f32 %v228, %v241
      %v249 = vmul.f32 %v229, %v241
      %v250 = vmul.f32 %v230, %v241
      %v251 = vmul.f32 %v231, %v241
      %v252 = vmul.f32 %v232, %v241
      %v253 = vmul.f32 %v233, %v241
      %v254 = vmul.f32 %v234, %v241
      %v255 = vmul.f32 %v235, %v241
      %v256 = vmul.f32 %v236, %v241
      %v257 = vmul.f32 %v237, %v241
      %v258 = vmul.f32 %v238, %v241
      %v259 = vld [vmem:[%s2] sm:$0x1]
      %v261 = vperm.slane %v259, 0
      %v263 = vadd.f32 %v243, %v261
      %v264 = vadd.f32 %v244, %v261
      %v265 = vadd.f32 %v245, %v261
      %v266 = vadd.f32 %v246, %v261
      %v267 = vadd.f32 %v247, %v261
      %v268 = vadd.f32 %v248, %v261
      %v269 = vadd.f32 %v249, %v261
      %v270 = vadd.f32 %v250, %v261
      %v271 = vadd.f32 %v251, %v261
      %v272 = vadd.f32 %v252, %v261
      %v273 = vadd.f32 %v253, %v261
      %v274 = vadd.f32 %v254, %v261
      %v275 = vadd.f32 %v255, %v261
      %v276 = vadd.f32 %v256, %v261
      %v277 = vadd.f32 %v257, %v261
      %v278 = vadd.f32 %v258, %v261
      %v279 = vld [vmem:[%s215] sm:$0xff]
      %v280 = vld [vmem:[%s215 + $0x8] sm:$0xff]
      %v281 = vld [vmem:[%s215 + $0x10] sm:$0xff]
      %v282 = vld [vmem:[%s215 + $0x18] sm:$0xff]
      %v283 = vld [vmem:[%s215 + $0x20] sm:$0xff]
      %v284 = vld [vmem:[%s215 + $0x28] sm:$0xff]
      %v285 = vld [vmem:[%s215 + $0x30] sm:$0xff]
      %v286 = vld [vmem:[%s215 + $0x38] sm:$0xff]
      %v287 = vld [vmem:[%s215 + $0x40] sm:$0xff]
      %v288 = vld [vmem:[%s215 + $0x48] sm:$0xff]
      %v289 = vld [vmem:[%s215 + $0x50] sm:$0xff]
      %v290 = vld [vmem:[%s215 + $0x58] sm:$0xff]
      %v291 = vld [vmem:[%s215 + $0x60] sm:$0xff]
      %v292 = vld [vmem:[%s215 + $0x68] sm:$0xff]
      %v293 = vld [vmem:[%s215 + $0x70] sm:$0xff]
      %v294 = vld [vmem:[%s215 + $0x78] sm:$0xff]
      %v295 = vadd.f32 %v263, %v279
      %v296 = vadd.f32 %v264, %v280
      %v297 = vadd.f32 %v265, %v281
      %v298 = vadd.f32 %v266, %v282
      %v299 = vadd.f32 %v267, %v283
      %v300 = vadd.f32 %v268, %v284
      %v301 = vadd.f32 %v269, %v285
      %v302 = vadd.f32 %v270, %v286
      %v303 = vadd.f32 %v271, %v287
      %v304 = vadd.f32 %v272, %v288
      %v305 = vadd.f32 %v273, %v289
      %v306 = vadd.f32 %v274, %v290
      %v307 = vadd.f32 %v275, %v291
      %v308 = vadd.f32 %v276, %v292
      %v309 = vadd.f32 %v277, %v293
      %v310 = vadd.f32 %v278, %v294
      %v311 = vmax.f32 %v295, 0.0
      %v312 = vmax.f32 %v296, 0.0
      %v313 = vmax.f32 %v297, 0.0
      %v314 = vmax.f32 %v298, 0.0
      %v315 = vmax.f32 %v299, 0.0
      %v316 = vmax.f32 %v300, 0.0
      %v317 = vmax.f32 %v301, 0.0
      %v318 = vmax.f32 %v302, 0.0
      %v319 = vmax.f32 %v303, 0.0
      %v320 = vmax.f32 %v304, 0.0
      %v321 = vmax.f32 %v305, 0.0
      %v322 = vmax.f32 %v306, 0.0
      %v323 = vmax.f32 %v307, 0.0
      %v324 = vmax.f32 %v308, 0.0
      %v325 = vmax.f32 %v309, 0.0
      %v326 = vmax.f32 %v310, 0.0
      %327 = vst [vmem:[%s221] sm:$0xff] %v311
      %328 = vst [vmem:[%s221 + $0x8] sm:$0xff] %v312
      %329 = vst [vmem:[%s221 + $0x10] sm:$0xff] %v313
      %330 = vst [vmem:[%s221 + $0x18] sm:$0xff] %v314
      %331 = vst [vmem:[%s221 + $0x20] sm:$0xff] %v315
      %332 = vst [vmem:[%s221 + $0x28] sm:$0xff] %v316
      %333 = vst [vmem:[%s221 + $0x30] sm:$0xff] %v317
      %334 = vst [vmem:[%s221 + $0x38] sm:$0xff] %v318
      %335 = vst [vmem:[%s221 + $0x40] sm:$0xff] %v319
      %336 = vst [vmem:[%s221 + $0x48] sm:$0xff] %v320
      %337 = vst [vmem:[%s221 + $0x50] sm:$0xff] %v321
      %338 = vst [vmem:[%s221 + $0x58] sm:$0xff] %v322
      %339 = vst [vmem:[%s221 + $0x60] sm:$0xff] %v323
      %340 = vst [vmem:[%s221 + $0x68] sm:$0xff] %v324
      %341 = vst [vmem:[%s221 + $0x70] sm:$0xff] %v325
      %342 = vst [vmem:[%s221 + $0x78] sm:$0xff] %v326
      %s343 = smul.u32 16, %s15
      %p344 = scmp.lt.s32.totalorder %s343, 63
      %s345 = scalar_select %p344, %s343, 63
      %s346 = smul.addr %s345, 8
      %s347 = scalar_lea.vmem %s4, %s346
      // Predicated region
      $region37: #{basic_block_forward.7} parent=35 // pred_check
        %p348 = pneg %p127
      $region38: #{basic_block_forward.7} parent=35 // pred_check_branch
        %350 = sbr.rel (%p348) target = $region40
      $region39: #{basic_block_forward.7} parent=35 // pred_region
        %s351 = smul.u32 16, %s15
      $region40: #{basic_block_forward.7} parent=35 // pred_fallthru
        _
    $region36: #{basic_block_forward.7} parent=5 // pred_fallthru
      _
    %p352 = scmp.le.s32.totalorder 2, %s10
    // Predicated region
    $region41: #{basic_block_forward.7} parent=5 // pred_check
      %p353 = pneg %p352
    $region42: #{basic_block_forward.7} parent=5 // pred_check_branch
      %355 = sbr.rel (%p353) target = $region44
    $region43: #{basic_block_forward.7} parent=5 // pred_region
      %s356 = ssub.s32 %s10, 2
      // Predicated region
      $region45: #{basic_block_forward.7} parent=43 // pred_check
        %p357 = pneg %p133
      $region46: #{basic_block_forward.7} parent=43 // pred_check_branch
        %359 = sbr.rel (%p357) target = $region48
      $region47: #{basic_block_forward.7} parent=43 // pred_region
        %s360 = smul.u32 16, %s16
        %p361 = scmp.lt.s32.totalorder %s360, 63
        %s362 = scalar_select %p361, %s360, 63
        %s363 = smul.addr %s362, 8
        %s364 = scalar_lea.vmem %s4, %s363
      $region48: #{basic_block_forward.7} parent=43 // pred_fallthru
        _
    $region44: #{basic_block_forward.7} parent=5 // pred_fallthru
      _
  $region6: #{basic_block_forward.7} parent=0 // loop_footer
    %s14 = sadd.s32 1, %s10
  $region7: #{basic_block_forward.7} parent=0 // loop_footer_branch
    %9 = sbr.rel target = $region3
  $region8: #{basic_block_forward.7} parent=0 // loop_exit
    _

</llo_original>
